<compile_context>
chip_gen: v7x
topology: tpu7x:2x2x1
jax: 0.10.0
libtpu: 0.0.40
codegen_flags: <defaults>
</compile_context>

<pallas_src>
import functools

import jax
import jax.numpy as jnp
from jax import lax
from jax.experimental import pallas as pl
from jax.experimental.pallas import tpu as pltpu

_LANES = 128
_SUBLANES = 8


def _round_up(x, m):
    return (x + m - 1) // m * m


def _cdiv(a, b):
    return (a + b - 1) // b


def _jsd_block_kernel(log_q_ref, log_p_ref, out_ref, *, beta, v_total, tile_v):
    """One (tile_m, tile_v) block -> accumulate lane-folded per-row loss into (tile_m, 128)."""
    tile_m = out_ref.shape[0]
    n_fold = tile_v // _LANES
    need_mask = (v_total % tile_v) != 0  # static: is there a vocab tail anywhere?

    k = pl.program_id(1)

    @pl.when(k == 0)
    def _init():
        out_ref[...] = jnp.zeros_like(out_ref)

    # Number of in-bounds vocab columns in this block (>= tile_v for interior blocks).
    v_limit = v_total - k * tile_v

    # Static fold over 128-lane chunks (n_fold <= 8 by construction). Each chunk
    # accumulates directly into the resident output block so no (tile_m, 128)
    # value is carried across chunks (tight vreg live ranges, no spill chains).
    for c in range(n_fold):
        x = log_q_ref[:, pl.ds(c * _LANES, _LANES)].astype(jnp.float32)  # student
        y = log_p_ref[:, pl.ds(c * _LANES, _LANES)].astype(jnp.float32)  # teacher
        if need_mask:
            col = c * _LANES + lax.broadcasted_iota(jnp.int32, (tile_m, _LANES), 1)
            ok = col < v_limit
            # x == y == 0 contributes exactly 0 loss in every beta branch below,
            # and masking the inputs keeps inf/NaN out of the chain entirely.
            x = jnp.where(ok, x, 0.0)
            y = jnp.where(ok, y, 0.0)
        if beta == 0.0:
            lc = jnp.exp(y) * (y - x)            # forward KL(P || Q)
        elif beta == 1.0:
            lc = jnp.exp(x) * (x - y)            # reverse KL(Q || P)
        else:
            q = jnp.exp(x)
            p = jnp.exp(y)
            m = beta * p + (1.0 - beta) * q
            # Guard: m can underflow to 0; 0 * log(0) must be 0, not NaN.
            log_m = jnp.where(m > 0, jnp.log(m), 0.0)
            lc = beta * p * y + (1.0 - beta) * q * x - m * log_m
        out_ref[...] += lc


def _pick_vmem_limit_bytes():
    cap = 64 * 1024 * 1024  # conservative fallback (v7x physical VMEM per TC)
    try:
        info = pltpu.get_tpu_info()
        cap = int(getattr(info, "vmem_capacity_bytes", cap))
    except Exception:
        pass
    # ~0.75 of physical: ~96 MiB on v5e/v6e (128 MiB parts), ~48 MiB on v7x (64 MiB).
    return int(cap) * 3 // 4


def _pick_tiles(BT, V, itemsize, vmem_limit):
    # Vocab tile: fixed lane-aligned width, capped at 1024 so the static fold loop
    # has <= 8 chunks. The vocab grid uses cdiv, so tile_v need NOT divide V; the
    # tail block is masked in-kernel. DMA rows are 4 KiB contiguous at f32.
    tile_v = min(_round_up(V, _LANES), 1024)

    # Row tile:
    #  (a) VMEM budget: double-buffered inputs (2 arrays x 2 buffers) plus the
    #      double-buffered (tile_m, 128) f32 accumulator in ~60% of the scoped
    #      limit (rest is per-chunk f32 temporaries + compiler headroom),
    #  (b) block-area cap (512K elements) to bound per-step unrolled code size,
    #  (c) hard 1024-row cap.
    budget = vmem_limit * 6 // 10
    per_row_bytes = 2 * 2 * tile_v * itemsize + 2 * _LANES * 4
    tile_m = budget // per_row_bytes
    tile_m = min(tile_m, (512 * 1024) // tile_v, 1024)
    tile_m = max(_SUBLANES, (tile_m // _SUBLANES) * _SUBLANES)

    # Rebalance against BT (bound edge-block waste) and keep >= 2 row blocks
    # whenever possible so the "parallel" row axis feeds both v7x TensorCores.
    n_row_blocks = _cdiv(BT, tile_m)
    if BT > _SUBLANES:
        n_row_blocks = max(n_row_blocks, 2)
    tile_m = min(tile_m, _round_up(_cdiv(BT, n_row_blocks), _SUBLANES))

    # Explicit footprint check: inputs + output + ~8 live (tile_m, 128) f32 temps.
    est = (2 * 2 * tile_m * tile_v * itemsize
           + 2 * tile_m * _LANES * 4
           + 8 * tile_m * _LANES * 4)
    assert est < vmem_limit, ("VMEM estimate exceeds limit", est, vmem_limit, tile_m, tile_v)
    return tile_m, tile_v


def liger_jsd_pallas(log_q, log_p, shift_labels=None, *, beta=0.5, ignore_index=-100):
    BT, V = log_q.shape
    assert log_p.shape == (BT, V)

    itemsize = jnp.dtype(log_q.dtype).itemsize
    vmem_limit = _pick_vmem_limit_bytes()
    tile_m, tile_v = _pick_tiles(BT, V, itemsize, vmem_limit)

    n_row_blocks = _cdiv(BT, tile_m)
    n_vocab_blocks = _cdiv(V, tile_v)

    kernel = functools.partial(
        _jsd_block_kernel, beta=float(beta), v_total=V, tile_v=tile_v)

    # Kernel output: lane-dense per-row partial sums (BT, 128). Row axis is
    # "parallel" (megacore-friendly, disjoint output blocks); vocab axis is the
    # "arbitrary" reduction axis (last) with the output block resident across it.
    # Edge blocks (rows and vocab) are handled by Pallas' partial-block semantics;
    # only the vocab tail needs in-kernel masking (OOB output rows are discarded).
    partial = pl.pallas_call(
        kernel,
        out_shape=jax.ShapeDtypeStruct((BT, _LANES), jnp.float32),
        grid_spec=pltpu.PrefetchScalarGridSpec(
            num_scalar_prefetch=0,
            grid=(n_row_blocks, n_vocab_blocks),
            in_specs=[
                pl.BlockSpec((tile_m, tile_v), lambda i, k: (i, k)),
                pl.BlockSpec((tile_m, tile_v), lambda i, k: (i, k)),
            ],
            out_specs=pl.BlockSpec((tile_m, _LANES), lambda i, k: (i, 0)),
        ),
        compiler_params=pltpu.CompilerParams(
            dimension_semantics=("parallel", "arbitrary"),
            vmem_limit_bytes=vmem_limit,
        ),
    )(log_q, log_p)

    # Glue: final lane/row reduction, ignore-index masking and normalization in JAX
    # (tiny vs the 2*BT*V input stream).
    row_sums = jnp.sum(partial, axis=-1)  # (BT,)
    if shift_labels is not None:
        mask = (shift_labels != ignore_index).astype(jnp.float32)
        n_non_ignore = jnp.sum(mask)
        total = jnp.sum(row_sums * mask)
    else:
        n_non_ignore = jnp.float32(BT)
        total = jnp.sum(row_sums)

    loss = jnp.where(n_non_ignore > 0, total / n_non_ignore, jnp.float32(0.0))
    return loss.astype(log_q.dtype)


def liger_jsd_ref(log_q, log_p, shift_labels=None, *, beta=0.5, ignore_index=-100):
    x = log_q.astype(jnp.float32)
    y = log_p.astype(jnp.float32)
    if beta == 0.0:
        loss = jnp.exp(y) * (y - x)
    elif beta == 1.0:
        loss = jnp.exp(x) * (x - y)
    else:
        q = jnp.exp(x)
        p = jnp.exp(y)
        m = beta * p + (1.0 - beta) * q
        log_m = jnp.where(m > 0, jnp.log(m), 0.0)
        loss = beta * p * y + (1.0 - beta) * q * x - m * log_m
    if shift_labels is not None:
        mask = (shift_labels != ignore_index).astype(jnp.float32)
        n = jnp.sum(mask)
    else:
        mask = jnp.ones((x.shape[0],), jnp.float32)
        n = jnp.float32(x.shape[0])
    total = jnp.sum(loss * mask[:, None])
    return jnp.where(n > 0, total / n, 0.0).astype(log_q.dtype)


if __name__ == "__main__":
    ignore_index = -100
    key = jax.random.PRNGKey(0)
    k1, k2, k3, k4, k5, k6, k7, k8 = jax.random.split(key, 8)

    # Case 1/2: aligned shapes (BT, V) = (16, 128) -- no masking path.
    BT, V = 16, 128
    log_q = jax.nn.log_softmax(jax.random.normal(k1, (BT, V), jnp.float32), axis=-1)
    log_p = jax.nn.log_softmax(jax.random.normal(k2, (BT, V), jnp.float32), axis=-1)
    labels = jax.random.randint(k3, (BT,), 0, V, dtype=jnp.int32)
    labels = labels.at[0].set(ignore_index).at[5].set(ignore_index)

    out1 = jax.block_until_ready(
        liger_jsd_pallas(log_q, log_p, labels, beta=0.1, ignore_index=ignore_index))
    ref1 = liger_jsd_ref(log_q, log_p, labels, beta=0.1, ignore_index=ignore_index)
    assert jnp.allclose(out1, ref1, atol=1e-5, rtol=1e-5), (out1, ref1)

    out2 = jax.block_until_ready(liger_jsd_pallas(log_q, log_p, None, beta=0.5))
    ref2 = liger_jsd_ref(log_q, log_p, None, beta=0.5)
    assert jnp.allclose(out2, ref2, atol=1e-5, rtol=1e-5), (out2, ref2)

    # Case 3/4: unaligned shapes (12, 200): partial row block + vocab-tail mask,
    # forward/reverse KL limits (beta = 0 / 1).
    BT2, V2 = 12, 200
    log_q2 = jax.nn.log_softmax(jax.random.normal(k4, (BT2, V2), jnp.float32), axis=-1)
    log_p2 = jax.nn.log_softmax(jax.random.normal(k5, (BT2, V2), jnp.float32), axis=-1)
    labels2 = jnp.arange(BT2, dtype=jnp.int32).at[3].set(ignore_index)

    out3 = jax.block_until_ready(
        liger_jsd_pallas(log_q2, log_p2, labels2, beta=0.0, ignore_index=ignore_index))
    ref3 = liger_jsd_ref(log_q2, log_p2, labels2, beta=0.0, ignore_index=ignore_index)
    assert jnp.allclose(out3, ref3, atol=1e-5, rtol=1e-5), (out3, ref3)

    out4 = jax.block_until_ready(liger_jsd_pallas(log_q2, log_p2, None, beta=1.0))
    ref4 = liger_jsd_ref(log_q2, log_p2, None, beta=1.0)
    assert jnp.allclose(out4, ref4, atol=1e-5, rtol=1e-5), (out4, ref4)

    # Case 5: multiple vocab blocks + tail mask + partial row blocks: (24, 2500).
    BT3, V3 = 24, 2500
    log_q3 = jax.nn.log_softmax(jax.random.normal(k6, (BT3, V3), jnp.float32), axis=-1)
    log_p3 = jax.nn.log_softmax(jax.random.normal(k7, (BT3, V3), jnp.float32), axis=-1)
    labels3 = jax.random.randint(k8, (BT3,), 0, V3, dtype=jnp.int32)
    labels3 = labels3.at[2].set(ignore_index).at[17].set(ignore_index)

    out5 = jax.block_until_ready(
        liger_jsd_pallas(log_q3, log_p3, labels3, beta=0.3, ignore_index=ignore_index))
    ref5 = liger_jsd_ref(log_q3, log_p3, labels3, beta=0.3, ignore_index=ignore_index)
    assert jnp.allclose(out5, ref5, atol=1e-5, rtol=1e-5), (out5, ref5)

    # TODO(synk): backward pass (per-element dX) of LigerJSDFunction is not implemented; forward only.
    print("KERNEL_OK")
</pallas_src>

<mosaic_0001>
module attributes {stable_mosaic.version = 11 : i64} {
  func.func @_jsd_block_kernel(%arg0: i32, %arg1: i32, %arg2: memref<8x128xf32, #tpu.memory_space<vmem>>, %arg3: memref<8x128xf32, #tpu.memory_space<vmem>>, %arg4: memref<8x128xf32, #tpu.memory_space<vmem>>) attributes {dimension_semantics = [#tpu.dimension_semantics<parallel>, #tpu.dimension_semantics<arbitrary>], iteration_bounds = array<i64: 2, 1>, scalar_prefetch = 0 : i64, scratch_operands = 0 : i64, tpu.core_type = #tpu.core_type<tc>, window_params = [{transform_indices = @transform_0, window_bounds = array<i64: 8, 128>}, {transform_indices = @transform_1, window_bounds = array<i64: 8, 128>}, {transform_indices = @transform_2, window_bounds = array<i64: 8, 128>}]} {
    %c0_i32 = arith.constant 0 : i32
    %0 = arith.cmpi eq, %arg1, %c0_i32 : i32
    %1 = arith.extui %0 : i1 to i32
    %c0_i32_0 = arith.constant 0 : i32
    %2 = arith.cmpi ne, %1, %c0_i32_0 : i32
    scf.if %2 {
      %cst_13 = arith.constant 0.000000e+00 : f32
      %29 = vector.broadcast %cst_13 : f32 to vector<8x128xf32>
      %c0_14 = arith.constant 0 : index
      %c0_15 = arith.constant 0 : index
      %30 = vector.load %arg4[%c0_14, %c0_15] : memref<8x128xf32, #tpu.memory_space<vmem>>, vector<8x128xf32>
      tpu.vector_store %arg4[%c0_14, %c0_15], %29 {strides = array<i32>} : memref<8x128xf32, #tpu.memory_space<vmem>>, vector<8x128xf32>,
    } else {
    }
    %c0 = arith.constant 0 : index
    %c0_1 = arith.constant 0 : index
    %3 = vector.load %arg2[%c0, %c0_1] : memref<8x128xf32, #tpu.memory_space<vmem>>, vector<8x128xf32>
    %c0_2 = arith.constant 0 : index
    %c0_3 = arith.constant 0 : index
    %4 = vector.load %arg3[%c0_2, %c0_3] : memref<8x128xf32, #tpu.memory_space<vmem>>, vector<8x128xf32>
    %5 = math.exp %3 : vector<8x128xf32>
    %6 = math.exp %4 : vector<8x128xf32>
    %cst = arith.constant 1.000000e-01 : f32
    %7 = vector.broadcast %cst : f32 to vector<8x128xf32>
    %8 = arith.mulf %7, %6 : vector<8x128xf32>
    %cst_4 = arith.constant 0.899999976 : f32
    %9 = vector.broadcast %cst_4 : f32 to vector<8x128xf32>
    %10 = arith.mulf %9, %5 : vector<8x128xf32>
    %11 = arith.addf %8, %10 : vector<8x128xf32>
    %cst_5 = arith.constant 0.000000e+00 : f32
    %12 = vector.broadcast %cst_5 : f32 to vector<8x128xf32>
    %13 = arith.cmpf ogt, %11, %12 : vector<8x128xf32>
    %14 = math.log %11 : vector<8x128xf32>
    %cst_6 = arith.constant 0.000000e+00 : f32
    %15 = vector.broadcast %cst_6 : f32 to vector<8x128xf32>
    %16 = arith.select %13, %14, %15 : vector<8x128xi1>, vector<8x128xf32>
    %cst_7 = arith.constant 1.000000e-01 : f32
    %17 = vector.broadcast %cst_7 : f32 to vector<8x128xf32>
    %18 = arith.mulf %17, %6 : vector<8x128xf32>
    %19 = arith.mulf %18, %4 : vector<8x128xf32>
    %cst_8 = arith.constant 0.899999976 : f32
    %20 = vector.broadcast %cst_8 : f32 to vector<8x128xf32>
    %21 = arith.mulf %20, %5 : vector<8x128xf32>
    %22 = arith.mulf %21, %3 : vector<8x128xf32>
    %23 = arith.addf %19, %22 : vector<8x128xf32>
    %24 = arith.mulf %11, %16 : vector<8x128xf32>
    %25 = arith.subf %23, %24 : vector<8x128xf32>
    %c0_9 = arith.constant 0 : index
    %c0_10 = arith.constant 0 : index
    %26 = vector.load %arg4[%c0_9, %c0_10] : memref<8x128xf32, #tpu.memory_space<vmem>>, vector<8x128xf32>
    %27 = arith.addf %26, %25 : vector<8x128xf32>
    %c0_11 = arith.constant 0 : index
    %c0_12 = arith.constant 0 : index
    %28 = vector.load %arg4[%c0_11, %c0_12] : memref<8x128xf32, #tpu.memory_space<vmem>>, vector<8x128xf32>
    tpu.vector_store %arg4[%c0_11, %c0_12], %27 {strides = array<i32>} : memref<8x128xf32, #tpu.memory_space<vmem>>, vector<8x128xf32>,
    return
  }
  func.func @transform_0(%arg0: i32, %arg1: i32) -> (i32, i32) {
    %c0_i32 = arith.constant 0 : i32
    return %arg0, %arg1 : i32, i32
  }
  func.func @transform_1(%arg0: i32, %arg1: i32) -> (i32, i32) {
    %c0_i32 = arith.constant 0 : i32
    return %arg0, %arg1 : i32, i32
  }
  func.func @transform_2(%arg0: i32, %arg1: i32) -> (i32, i32) {
    %c0_i32 = arith.constant 0 : i32
    %c0_i32_0 = arith.constant 0 : i32
    return %arg0, %c0_i32 : i32, i32
  }
}

</mosaic_0001>

<llo_original>
// kernel: tpu_custom_call.1
$region0: #{tpu_custom_call.1}
  #allocation0 [shape = 'u32[]', space=smem, size = 0x4, offset = 0x4, fixed_abs, tag = 'smem constant byte address 0x4 - core index']
  #allocation1 [shape = 'u32[144,128]{1,0:T(1,128)}', space=vmem, size = 0x12000, scoped, tag = 'internal scratch']
  %s0 = inlined_call_operand.hbm [shape: f32[16,128], index: 0, kind: input, shape index: {}]
  %s1 = inlined_call_operand.hbm [shape: f32[16,128], index: 1, kind: input, shape index: {}]
  %s2 = inlined_call_operand.hbm [shape: f32[16,128], index: 2, kind: output, shape index: {}]
  %s3 = sld [smem:[#allocation0]]
  $region53: #{tpu_custom_call.1} parent=0
    _
  %s5 = ssub.s32 1, %s3
  %s6 = scalar_select 0, %s5, %s3
  $region1: #{tpu_custom_call.1} parent=0
    #allocation2 [shape = 'u8[8192]{0}', space=vmem, size = 0x2000, scoped, tag = 'input window, operand 0']
    #allocation3 [shape = 's32[2]{0}', space=sflag, size = 0x8, scoped, tag = 'scoped memory for tpu_custom_call.1']
    #allocation4 [shape = 's32[2]{0}', space=sflag, size = 0x8, scoped, tag = 'scoped memory for tpu_custom_call.1']
    #allocation5 [shape = 'u8[8192]{0}', space=vmem, size = 0x2000, scoped, tag = 'input window, operand 1']
    #allocation6 [shape = 's32[2]{0}', space=sflag, size = 0x8, scoped, tag = 'scoped memory for tpu_custom_call.1']
    #allocation7 [shape = 'u8[8192]{0}', space=vmem, size = 0x2000, scoped, tag = 'output window, operand 0']
    %7 = vsyncpa [#allocation3], 0
    %s8 = scalar_lea.sflag [#allocation3], 1
    %9 = vsyncpa %s8, 0
    %10 = vsyncpa [#allocation6], 0
    %s11 = scalar_lea.sflag [#allocation6], 1
    %12 = vsyncpa %s11, 0
    %13 = vsyncpa [#allocation4], 0
    %s14 = scalar_lea.sflag [#allocation4], 1
    %15 = vsyncpa %s14, 0
    loop: start=0, step=1, limit=4
    $region2: #{tpu_custom_call.1} parent=1 // loop_pre_header
      _
    $region3: #{tpu_custom_call.1} parent=1 // loop_header
      %s17 = sphi 0, %s21
      %p18 = scmp.ge.s32.totalorder %s17, 4
      %s24 = sphi 0, %s36
      %s25 = sphi 0, %s32
      %s26 = sphi 0, %s24
      %s27 = sphi 0, %s25
      %s28 = sphi 0, %s26
      %s29 = sphi 0, %s27
      %s41 = sphi 0, %s43
      %s44 = sphi 0, %s41
      %s45 = sphi 0, %s44
      %s61 = sphi 0, %s45
      %s69 = sphi 0, %s71
      %s72 = sphi 0, %s69
      %s73 = sphi 0, %s72
      %s89 = sphi 0, %s73
      %s95 = sphi 0, %s97
      %s98 = sphi 0, %s95
      %s99 = sphi 0, %s98
      %s115 = sphi 0, %s99
    $region4: #{tpu_custom_call.1} parent=1 // loop_header_branch
      %20 = sbr.rel (%p18) target = $region8
    $region5: #{tpu_custom_call.1} parent=1 // loop_body
      %s22 = ssub.s32 %s17, 1
      %s23 = ssub.s32 %s17, 2
      %s30 = sadd.s32 1, %s25
      %p31 = scmp.ge.s32.totalorder %s30, 1
      %s32 = scalar_select %p31, 0, %s30
      %s33 = sadd.s32 1, %s24
      %s34 = scalar_select %p31, %s33, %s24
      %p35 = scmp.ge.s32.totalorder %s34, 2
      %s36 = scalar_select %p35, 0, %s34
      %s37 = ssub.s32 %s24, %s36
      %s38 = ssub.s32 %s25, %s32
      %s39 = sor.u32 %s37, %s38
      %p40 = scmp.eq.s32.totalorder %s39, 0
      %s42 = sadd.s32 %s41, 1
      %s43 = scalar_select %p40, %s41, %s42
      %p46 = pneg %p40
      %p47 = scmp.eq.s32.totalorder %s17, 1
      %p48 = por %p46, %p47
      %p49 = scmp.ne.s32.totalorder %s41, %s44
      %p50 = scmp.eq.s32.totalorder %s17, 0
      %p51 = por %p49, %p50
      %p52 = scmp.ne.s32.totalorder %s41, %s44
      %p53 = scmp.eq.s32.totalorder %s22, 1
      %p54 = por %p52, %p53
      %p55 = scmp.ne.s32.totalorder %s44, %s45
      %p56 = scmp.eq.s32.totalorder %s22, 0
      %p57 = por %p55, %p56
      %p58 = scmp.ne.s32.totalorder %s44, %s45
      %p59 = scmp.eq.s32.totalorder %s23, 1
      %p60 = por %p58, %p59
      %p62 = scmp.ne.s32.totalorder %s45, %s61
      %p63 = scmp.eq.s32.totalorder %s23, 0
      %p64 = por %p62, %p63
      %s65 = ssub.s32 %s24, %s36
      %s66 = ssub.s32 %s25, %s32
      %s67 = sor.u32 %s65, %s66
      %p68 = scmp.eq.s32.totalorder %s67, 0
      %s70 = sadd.s32 %s69, 1
      %s71 = scalar_select %p68, %s69, %s70
      %p74 = pneg %p68
      %p75 = scmp.eq.s32.totalorder %s17, 1
      %p76 = por %p74, %p75
      %p77 = scmp.ne.s32.totalorder %s69, %s72
      %p78 = scmp.eq.s32.totalorder %s17, 0
      %p79 = por %p77, %p78
      %p80 = scmp.ne.s32.totalorder %s69, %s72
      %p81 = scmp.eq.s32.totalorder %s22, 1
      %p82 = por %p80, %p81
      %p83 = scmp.ne.s32.totalorder %s72, %s73
      %p84 = scmp.eq.s32.totalorder %s22, 0
      %p85 = por %p83, %p84
      %p86 = scmp.ne.s32.totalorder %s72, %s73
      %p87 = scmp.eq.s32.totalorder %s23, 1
      %p88 = por %p86, %p87
      %p90 = scmp.ne.s32.totalorder %s73, %s89
      %p91 = scmp.eq.s32.totalorder %s23, 0
      %p92 = por %p90, %p91
      %s93 = ssub.s32 %s24, %s36
      %p94 = scmp.eq.s32.totalorder %s93, 0
      %s96 = sadd.s32 %s95, 1
      %s97 = scalar_select %p94, %s95, %s96
      %p100 = pneg %p94
      %p101 = scmp.eq.s32.totalorder %s17, 1
      %p102 = por %p100, %p101
      %p103 = scmp.ne.s32.totalorder %s95, %s98
      %p104 = scmp.eq.s32.totalorder %s17, 0
      %p105 = por %p103, %p104
      %p106 = scmp.ne.s32.totalorder %s95, %s98
      %p107 = scmp.eq.s32.totalorder %s22, 1
      %p108 = por %p106, %p107
      %p109 = scmp.ne.s32.totalorder %s98, %s99
      %p110 = scmp.eq.s32.totalorder %s22, 0
      %p111 = por %p109, %p110
      %p112 = scmp.ne.s32.totalorder %s98, %s99
      %p113 = scmp.eq.s32.totalorder %s23, 1
      %p114 = por %p112, %p113
      %p116 = scmp.ne.s32.totalorder %s99, %s115
      %p117 = scmp.eq.s32.totalorder %s23, 0
      %p118 = por %p116, %p117
      %p119 = scmp.le.s32.totalorder 1, %s17
      %p120 = scmp.lt.s32.totalorder %s17, 3
      %p121 = pnand %p119, %p120
      %p122 = pneg %p121
      // Predicated region
      $region9: #{tpu_custom_call.1} parent=5 // pred_check
        _
      $region10: #{tpu_custom_call.1} parent=5 // pred_check_branch
        %124 = sbr.rel (%p121) target = $region12
      $region11: #{tpu_custom_call.1} parent=5 // pred_region
        %s125 = ssub.s32 %s17, 1
      $region12: #{tpu_custom_call.1} parent=5 // pred_fallthru
        _
      %p126 = scmp.lt.s32.totalorder %s17, 2
      // Predicated region
      $region13: #{tpu_custom_call.1} parent=5 // pred_check
        %p127 = pneg %p126
      $region14: #{tpu_custom_call.1} parent=5 // pred_check_branch
        %129 = sbr.rel (%p127) target = $region16
      $region15: #{tpu_custom_call.1} parent=5 // pred_region
        // Predicated region
        $region17: #{tpu_custom_call.1} parent=15 // pred_check
          %p130 = pneg %p51
        $region18: #{tpu_custom_call.1} parent=15 // pred_check_branch
          %132 = sbr.rel (%p130) target = $region20
        $region19: #{tpu_custom_call.1} parent=15 // pred_region
          %s133 = sand.u32 %s41, 1
          %s134 = scalar_lea.sflag [#allocation3], %s133
          %s135 = sand.u32 %s41, 1
          %s136 = smul.addr %s135, 8
          %s137 = scalar_lea.vmem [#allocation2], %s136
          %s139 = ssub.s32 128, 128
          %140 = vsyncadd %s134, %s139
          %s141 = sadd.s32 %s25, %s24
          %s142 = smul.addr %s141, 128
          %s143 = scalar_lea.hbm %s0, %s142
          %s145 = sshll.u32 %s137, 4
          %s146 = int_to_ptr.vmem [resolvable:$true] %s145
          %148 = dma.hbm_to_vmem [thread:$0]  %s143, 128, %s146, %s134
        $region20: #{tpu_custom_call.1} parent=15 // pred_fallthru
          _
        // Predicated region
        $region21: #{tpu_custom_call.1} parent=15 // pred_check
          %p149 = pneg %p79
        $region22: #{tpu_custom_call.1} parent=15 // pred_check_branch
          %151 = sbr.rel (%p149) target = $region24
        $region23: #{tpu_custom_call.1} parent=15 // pred_region
          %s152 = sand.u32 %s69, 1
          %s153 = scalar_lea.sflag [#allocation6], %s152
          %s154 = sand.u32 %s69, 1
          %s155 = smul.addr %s154, 8
          %s156 = scalar_lea.vmem [#allocation5], %s155
          %s158 = ssub.s32 128, 128
          %159 = vsyncadd %s153, %s158
          %s160 = sadd.s32 %s25, %s24
          %s161 = smul.addr %s160, 128
          %s162 = scalar_lea.hbm %s1, %s161
          %s164 = sshll.u32 %s156, 4
          %s165 = int_to_ptr.vmem [resolvable:$true] %s164
          %167 = dma.hbm_to_vmem [thread:$0]  %s162, 128, %s165, %s153
        $region24: #{tpu_custom_call.1} parent=15 // pred_fallthru
          _
      $region16: #{tpu_custom_call.1} parent=5 // pred_fallthru
        _
      %p168 = scmp.le.s32.totalorder 1, %s17
      %p169 = scmp.lt.s32.totalorder %s17, 3
      %p170 = pnand %p168, %p169
      %p171 = pneg %p170
      // Predicated region
      $region25: #{tpu_custom_call.1} parent=5 // pred_check
        _
      $region26: #{tpu_custom_call.1} parent=5 // pred_check_branch
        %173 = sbr.rel (%p170) target = $region28
      $region27: #{tpu_custom_call.1} parent=5 // pred_region
        %s174 = ssub.s32 %s17, 1
        %s175 = sand.u32 %s44, 1
        %s176 = scalar_lea.sflag [#allocation3], %s175
        %s177 = sand.u32 %s44, 1
        %s178 = smul.addr %s177, 8
        %s179 = scalar_lea.vmem [#allocation2], %s178
        // Predicated region
        $region29: #{tpu_custom_call.1} parent=27 // pred_check
          %p180 = pneg %p57
        $region30: #{tpu_custom_call.1} parent=27 // pred_check_branch
          %182 = sbr.rel (%p180) target = $region32
        $region31: #{tpu_custom_call.1} parent=27 // pred_region
          %183 = dma.done %s176, 128
        $region32: #{tpu_custom_call.1} parent=27 // pred_fallthru
          _
        %s184 = sand.u32 %s72, 1
        %s185 = scalar_lea.sflag [#allocation6], %s184
        %s186 = sand.u32 %s72, 1
        %s187 = smul.addr %s186, 8
        %s188 = scalar_lea.vmem [#allocation5], %s187
        // Predicated region
        $region33: #{tpu_custom_call.1} parent=27 // pred_check
          %p189 = pneg %p85
        $region34: #{tpu_custom_call.1} parent=27 // pred_check_branch
          %191 = sbr.rel (%p189) target = $region36
        $region35: #{tpu_custom_call.1} parent=27 // pred_region
          %192 = dma.done %s185, 128
        $region36: #{tpu_custom_call.1} parent=27 // pred_fallthru
          _
        %s193 = sand.u32 %s44, 1
        %s194 = scalar_lea.sflag [#allocation3], %s193
        %s195 = sand.u32 %s44, 1
        %s196 = smul.addr %s195, 8
        %s197 = scalar_lea.vmem [#allocation2], %s196
        %p198 = pneg %p57
        %p199 = pneg %p54
        %s200 = sand.u32 %s72, 1
        %s201 = scalar_lea.sflag [#allocation6], %s200
        %s202 = sand.u32 %s72, 1
        %s203 = smul.addr %s202, 8
        %s204 = scalar_lea.vmem [#allocation5], %s203
        %p205 = pneg %p85
        %p206 = pneg %p82
        %p207 = pneg %p111
        %p208 = pneg %p108
        %s209 = sand.u32 %s98, 1
        %s210 = scalar_lea.sflag [#allocation4], %s209
        %s211 = sand.u32 %s98, 1
        %s212 = smul.addr %s211, 8
        %s213 = scalar_lea.vmem [#allocation7], %s212
        %p214 = scmp.eq.s32.totalorder %s27, 0
        // Predicated region
        $region37: #{tpu_custom_call.1} parent=27 // pred_check
          %p215 = pneg %p214
        $region38: #{tpu_custom_call.1} parent=27 // pred_check_branch
          %217 = sbr.rel (%p215) target = $region40
        $region39: #{tpu_custom_call.1} parent=27 // pred_region
          %218 = vst [vmem:[%s213] sm:$0xff] 0.0
        $region40: #{tpu_custom_call.1} parent=27 // pred_fallthru
          _
        %v219 = vld [vmem:[%s179] sm:$0xff]
        %v220 = vld [vmem:[%s188] sm:$0xff]
        %v221 = vmul.f32 %v219, 1.442695
        %v222 = vpow.pop %v221
        %v223 = vmul.f32 %v220, 1.442695
        %v224 = vpow.pop %v223
        %v225 = vmul.f32 %v224, 0.1
        %v226 = vmul.f32 %v222, 0.9
        %v227 = vadd.f32 %v225, %v226
        %vm228 = vcmp.gt.f32.partialorder %v227, 0.0
        %v229 = vlog2.pop %v227
        %v230 = vmul.f32 %v229, 0.6931472
        %v231 = vsel %vm228, %v230, 0.0
        %v232 = vmul.f32 %v225, %v220
        %v233 = vmul.f32 %v226, %v219
        %v234 = vadd.f32 %v232, %v233
        %v235 = vmul.f32 %v227, %v231
        %v236 = vsub.f32 %v234, %v235
        %v237 = vld [vmem:[%s213] sm:$0xff]
        %v238 = vadd.f32 %v237, %v236
        %239 = vst [vmem:[%s213] sm:$0xff] %v238
        %s240 = sand.u32 %s98, 1
        %s241 = scalar_lea.sflag [#allocation4], %s240
        %s242 = sand.u32 %s98, 1
        %s243 = smul.addr %s242, 8
        %s244 = scalar_lea.vmem [#allocation7], %s243
        // Predicated region
        $region41: #{tpu_custom_call.1} parent=27 // pred_check
          %p245 = pneg %p108
        $region42: #{tpu_custom_call.1} parent=27 // pred_check_branch
          %247 = sbr.rel (%p245) target = $region44
        $region43: #{tpu_custom_call.1} parent=27 // pred_region
          %s249 = ssub.s32 128, 128
          %250 = vsyncadd %s241, %s249
          %s251 = smul.addr %s26, 128
          %s252 = scalar_lea.hbm %s2, %s251
          %s254 = sshll.u32 %s244, 4
          %s255 = int_to_ptr.vmem [resolvable:$true] %s254
          %257 = dma.vmem_to_hbm [thread:$0]  %s255, 128, %s252, %s241
        $region44: #{tpu_custom_call.1} parent=27 // pred_fallthru
          _
      $region28: #{tpu_custom_call.1} parent=5 // pred_fallthru
        _
      %p258 = scmp.le.s32.totalorder 2, %s17
      // Predicated region
      $region45: #{tpu_custom_call.1} parent=5 // pred_check
        %p259 = pneg %p258
      $region46: #{tpu_custom_call.1} parent=5 // pred_check_branch
        %261 = sbr.rel (%p259) target = $region48
      $region47: #{tpu_custom_call.1} parent=5 // pred_region
        %s262 = ssub.s32 %s17, 2
        // Predicated region
        $region49: #{tpu_custom_call.1} parent=47 // pred_check
          %p263 = pneg %p114
        $region50: #{tpu_custom_call.1} parent=47 // pred_check_branch
          %265 = sbr.rel (%p263) target = $region52
        $region51: #{tpu_custom_call.1} parent=47 // pred_region
          %s266 = sand.u32 %s99, 1
          %s267 = scalar_lea.sflag [#allocation4], %s266
          %s268 = sand.u32 %s99, 1
          %s269 = smul.addr %s268, 8
          %s270 = scalar_lea.vmem [#allocation7], %s269
          %271 = dma.done %s267, 128
        $region52: #{tpu_custom_call.1} parent=47 // pred_fallthru
          _
      $region48: #{tpu_custom_call.1} parent=5 // pred_fallthru
        _
    $region6: #{tpu_custom_call.1} parent=1 // loop_footer
      %s21 = sadd.s32 1, %s17
    $region7: #{tpu_custom_call.1} parent=1 // loop_footer_branch
      %16 = sbr.rel target = $region3
    $region8: #{tpu_custom_call.1} parent=1 // loop_exit
      _
    %272 = vsyncpa [#allocation3], 1
    %s273 = scalar_lea.sflag [#allocation3], 1
    %274 = vsyncpa %s273, 1
    %275 = vsyncpa [#allocation6], 1
    %s276 = scalar_lea.sflag [#allocation6], 1
    %277 = vsyncpa %s276, 1
    %278 = vsyncpa [#allocation4], 1
    %s279 = scalar_lea.sflag [#allocation4], 1
    %280 = vsyncpa %s279, 1

</llo_original>
